<compile_context>
chip_gen: v6e
topology: v6e:2x2x1
jax: 0.10.0
libtpu: 0.0.40
codegen_flags: <defaults>
</compile_context>

<pallas_src>
import functools

import jax
import jax.numpy as jnp
from jax import lax
from jax.experimental import pallas as pl
from jax.experimental.pallas import tpu as pltpu

_EPS = 1e-5  # nn.BatchNorm1d default eps


def _round_up(a, b):
    return (a + b - 1) // b * b


def _vmem_params():
    """(tile-budget bytes, vmem_limit_bytes, row-tile cap), generation-aware."""
    try:
        cap = pltpu.get_tpu_info().vmem_capacity_bytes
    except Exception:  # conservative default is safe on every generation
        cap = 64 * 1024 * 1024
    if cap >= 96 * 1024 * 1024:                     # v5e / v6e: 128 MiB per core
        return 48 * 1024 * 1024, 64 * 1024 * 1024, 1024
    return 24 * 1024 * 1024, 32 * 1024 * 1024, 512  # v7x: 64 MiB per core


def _pick_row_tile(m_half, ck_pad, cp, budget_bytes, tm_cap):
    """Largest row tile (multiple of 16) whose pipelined footprint fits the budget."""
    tm = min(tm_cap, max(16, _round_up(m_half, 16)))
    if m_half >= 256:                 # keep >=2 grid tiles so both TCs get work
        tm = min(tm, max(16, _round_up((m_half + 1) // 2, 16)))
    while tm > 16:
        per_step = (4 * tm * ck_pad * 2      # two bf16 x tiles, double-buffered
                    + 2 * tm * cp * 4        # f32 output tile, double-buffered
                    + 4 * tm * cp * 4        # in-kernel f32 matmul temporaries
                    + 4 * ck_pad * cp * 2)   # resident bf16 weights
        if per_step <= budget_bytes:
            break
        tm = max(16, _round_up(tm // 2, 16))
    return tm


# ---------------- Pass 1: conv matmul (in VMEM only) + BN partial stats ------
def _conv_stats_kernel(x_ref, w_ref, s1_ref, m2_ref):
    y = jnp.dot(x_ref[...], w_ref[...], preferred_element_type=jnp.float32)
    s1 = jnp.sum(y, axis=0, keepdims=True)              # (1, Cp) per-channel sum
    mu = s1 * (1.0 / y.shape[0])                         # per-tile mean
    d = y - mu
    m2 = jnp.sum(d * d, axis=0, keepdims=True)           # centered second moment
    s1_ref[0] = s1
    m2_ref[0] = m2


# ------- Pass 2: conv recompute + BN apply + ReLU + MaxPool1d(2, 2) ----------
def _conv_bn_relu_pool_kernel(xe_ref, xo_ref, w_ref, scale_ref, shift_ref, o_ref):
    w = w_ref[...]
    sc = scale_ref[...]
    sh = shift_ref[...]
    ye = jnp.dot(xe_ref[...], w, preferred_element_type=jnp.float32)
    yo = jnp.dot(xo_ref[...], w, preferred_element_type=jnp.float32)
    ze = jnp.maximum(ye * sc + sh, 0.0)    # even conv positions
    zo = jnp.maximum(yo * sc + sh, 0.0)    # odd conv positions
    o_ref[...] = jnp.maximum(ze, zo)       # MaxPool1d(2, 2)


@functools.partial(jax.jit, static_argnames=("k", "p", "s"))
def conv1d_bn_relu_maxpool(x, w, b, gamma, beta, *, k, p, s):
    """x: (N, C_in, L_in) f32 (PyTorch NCL) -> (N, C_out, L_pool) f32.

    Training-mode forward of Conv1d + BatchNorm1d + ReLU + MaxPool1d(2,2).
    `b` (conv bias) is accepted but unused: batch-norm subtracts the per-channel
    batch mean, so the bias cancels exactly.
    """
    del b  # cancelled by training-mode BatchNorm
    N, Cin, Lin = x.shape
    Cout = w.shape[0]
    L_out = (Lin + 2 * p - k) // s + 1
    assert L_out >= 2, "need at least 2 conv output positions for MaxPool1d(2,2)"
    L_pool = L_out // 2
    CK = Cin * k
    CK_pad = _round_up(CK, 16)                          # bf16 sublane pack
    Cp = Cout if Cout < 64 else _round_up(Cout, 128)    # no blind 128-padding

    budget, vmem_limit, tm_cap = _vmem_params()

    # ---- glue: channels-last im2col via k strided slices (no XLA gather) ----
    xpad = jnp.pad(x.astype(jnp.bfloat16), ((0, 0), (0, 0), (p, p)))        # (N, Cin, L_pad)
    taps = [xpad[:, :, j:j + (L_out - 1) * s + 1:s] for j in range(k)]       # k x (N, Cin, L_out)
    patches = jnp.stack(taps, axis=-1)                                       # (N, Cin, L_out, k)
    xcol = jnp.transpose(patches, (0, 2, 1, 3)).reshape(N, L_out, CK)        # (N, L_out, Cin*k)
    xcol = jnp.pad(xcol, ((0, 0), (0, 0), (0, CK_pad - CK)))

    # Rows ordered [even positions | odd positions | leftover odd-L_out tail].
    M_half = N * L_pool
    xe = xcol[:, 0:2 * L_pool:2, :].reshape(M_half, CK_pad)
    xo = xcol[:, 1:2 * L_pool:2, :].reshape(M_half, CK_pad)

    TM = _pick_row_tile(M_half, CK_pad, Cp, budget, tm_cap)
    M_half_pad = _round_up(M_half, TM)

    parts = [jnp.pad(xe, ((0, M_half_pad - M_half), (0, 0))),
             jnp.pad(xo, ((0, M_half_pad - M_half), (0, 0)))]
    n_extra = N * (L_out - 2 * L_pool)   # odd L_out: last column feeds BN stats only
    if n_extra:
        extra = xcol[:, 2 * L_pool:, :].reshape(n_extra, CK_pad)
        parts.append(jnp.pad(extra, ((0, _round_up(n_extra, TM) - n_extra), (0, 0))))
    x_all = jnp.concatenate(parts, axis=0)                                   # (R_all, CK_pad) bf16
    R_all = x_all.shape[0]

    w_mat = jnp.transpose(w, (1, 2, 0)).reshape(CK, Cout).astype(jnp.bfloat16)
    w_mat = jnp.pad(w_mat, ((0, CK_pad - CK), (0, Cp - Cout)))               # (CK_pad, Cp)

    grid1 = R_all // TM
    grid2 = M_half_pad // TM

    # ---------------- Pass 1: per-tile BN partial statistics -----------------
    cost1 = pl.CostEstimate(
        flops=2 * R_all * CK_pad * Cp + 4 * R_all * Cp,
        transcendentals=0,
        bytes_accessed=R_all * CK_pad * 2 + CK_pad * Cp * 2 + 2 * grid1 * Cp * 4)

    s1p, m2p = pl.pallas_call(
        _conv_stats_kernel,
        out_shape=(jax.ShapeDtypeStruct((grid1, 1, Cp), jnp.float32),
                   jax.ShapeDtypeStruct((grid1, 1, Cp), jnp.float32)),
        grid_spec=pltpu.PrefetchScalarGridSpec(
            num_scalar_prefetch=0,
            grid=(grid1,),
            in_specs=[pl.BlockSpec((TM, CK_pad), lambda i: (i, 0)),
                      pl.BlockSpec((CK_pad, Cp), lambda i: (0, 0))],   # weights resident
            out_specs=(pl.BlockSpec((1, 1, Cp), lambda i: (i, 0, 0)),
                       pl.BlockSpec((1, 1, Cp), lambda i: (i, 0, 0)))),
        compiler_params=pltpu.CompilerParams(
            dimension_semantics=("parallel",),
            vmem_limit_bytes=vmem_limit),
        cost_estimate=cost1,
    )(x_all, w_mat)

    # ---- tiny per-channel glue: exact group combine + zero-pad-row removal ----
    s1 = s1p[:, 0, :Cout]                       # (grid1, Cout)
    m2 = m2p[:, 0, :Cout]
    n_all = jnp.float32(R_all)                  # rows seen by pass 1 (incl. zero pad)
    n_real = jnp.float32(N * L_out)             # real conv positions
    S = jnp.sum(s1, axis=0)                     # per-channel total sum (pad rows add 0)
    mean_all = S / n_all
    tile_mean = s1 / jnp.float32(TM)
    m2_all = jnp.sum(m2, axis=0) + jnp.float32(TM) * jnp.sum(
        (tile_mean - mean_all[None, :]) ** 2, axis=0)
    # remove the analytic contribution of the zero padding rows
    m2_real = m2_all - S * S * (n_all - n_real) / (n_all * n_real)
    mean = S / n_real
    var = jnp.maximum(m2_real / n_real, 0.0)    # biased variance, like torch training BN
    scale = gamma * lax.rsqrt(var + _EPS)
    shift = beta - mean * scale
    scale_p = jnp.pad(scale, (0, Cp - Cout)).reshape(1, Cp)
    shift_p = jnp.pad(shift, (0, Cp - Cout)).reshape(1, Cp)

    # -------- Pass 2: conv recompute + BN + ReLU + MaxPool1d(2, 2) -----------
    cost2 = pl.CostEstimate(
        flops=4 * M_half_pad * CK_pad * Cp + 6 * M_half_pad * Cp,
        transcendentals=0,
        bytes_accessed=(2 * M_half_pad * CK_pad * 2 + CK_pad * Cp * 2
                        + M_half_pad * Cp * 4 + 4 * Cp * 4))

    pooled = pl.pallas_call(
        _conv_bn_relu_pool_kernel,
        out_shape=jax.ShapeDtypeStruct((M_half_pad, Cp), jnp.float32),
        grid_spec=pltpu.PrefetchScalarGridSpec(
            num_scalar_prefetch=0,
            grid=(grid2,),
            in_specs=[pl.BlockSpec((TM, CK_pad), lambda i: (i, 0)),            # even half
                      pl.BlockSpec((TM, CK_pad), lambda i: (i + grid2, 0)),    # odd half
                      pl.BlockSpec((CK_pad, Cp), lambda i: (0, 0)),            # weights resident
                      pl.BlockSpec((1, Cp), lambda i: (0, 0)),                 # scale resident
                      pl.BlockSpec((1, Cp), lambda i: (0, 0))],                # shift resident
            out_specs=pl.BlockSpec((TM, Cp), lambda i: (i, 0))),
        compiler_params=pltpu.CompilerParams(
            dimension_semantics=("parallel",),
            vmem_limit_bytes=vmem_limit),
        cost_estimate=cost2,
    )(x_all, x_all, w_mat, scale_p, shift_p)

    out = pooled[:M_half, :Cout].reshape(N, L_pool, Cout)
    # TODO(synk): fold this NLC->NCL transpose into pass 2 (per-tile XLU
    # transpose to a channels-major output block) to save one HBM round-trip.
    return jnp.transpose(out, (0, 2, 1))           # back to PyTorch NCL


def _reference(x, w, b, gamma, beta, *, k, p, s):
    """Pure-JAX reference of the PyTorch training-mode forward.

    Conv operands are rounded to bf16 exactly like the kernel's MXU inputs so the
    comparison isolates kernel correctness from the deliberate mixed precision.
    Includes the conv bias (validates that BN cancels it)."""
    xr = x.astype(jnp.bfloat16).astype(jnp.float32)
    wr = w.astype(jnp.bfloat16).astype(jnp.float32)
    y = lax.conv_general_dilated(
        xr, wr, window_strides=(s,), padding=[(p, p)],
        dimension_numbers=("NCH", "OIH", "NCH"),
        precision=lax.Precision.HIGHEST,
    ) + b[None, :, None]
    mean = jnp.mean(y, axis=(0, 2), keepdims=True)
    var = jnp.var(y, axis=(0, 2), keepdims=True)       # biased, like torch training BN
    yn = (y - mean) * lax.rsqrt(var + _EPS) * gamma[None, :, None] + beta[None, :, None]
    yr = jnp.maximum(yn, 0.0)
    Nb, C, L = yr.shape
    Lp = L // 2
    return jnp.max(yr[:, :, :2 * Lp].reshape(Nb, C, Lp, 2), axis=-1)


if __name__ == "__main__":
    # Module hyper-params (conv1d_bn_relu_maxpool(ch_in, ch_out, k, p, s))
    ch_in, ch_out, k, p, s = 4, 8, 3, 1, 1
    N, L = 2, 16

    key = jax.random.PRNGKey(0)
    kx, kw, kb, kg, kbt = jax.random.split(key, 5)
    x = jax.random.normal(kx, (N, ch_in, L), dtype=jnp.float32)
    w = jax.random.normal(kw, (ch_out, ch_in, k), dtype=jnp.float32) * 0.1
    b = jax.random.normal(kb, (ch_out,), dtype=jnp.float32) * 0.1
    gamma = 1.0 + 0.1 * jax.random.normal(kg, (ch_out,), dtype=jnp.float32)
    beta = 0.1 * jax.random.normal(kbt, (ch_out,), dtype=jnp.float32)

    out = conv1d_bn_relu_maxpool(x, w, b, gamma, beta, k=k, p=p, s=s)
    out = jax.block_until_ready(out)

    ref = _reference(x, w, b, gamma, beta, k=k, p=p, s=s)
    assert out.shape == (N, ch_out, L // 2), out.shape
    err = float(jnp.max(jnp.abs(out - ref)))
    assert err < 5e-4, err

    print("KERNEL_OK")
</pallas_src>

<mosaic_0001>
module attributes {stable_mosaic.version = 11 : i64} {
  func.func @_conv_stats_kernel(%arg0: i32, %arg1: memref<16x16xbf16, #tpu.memory_space<vmem>>, %arg2: memref<16x8xbf16, #tpu.memory_space<vmem>>, %arg3: memref<1x1x8xf32, #tpu.memory_space<vmem>>, %arg4: memref<1x1x8xf32, #tpu.memory_space<vmem>>) attributes {dimension_semantics = [#tpu.dimension_semantics<parallel>], iteration_bounds = array<i64: 2>, scalar_prefetch = 0 : i64, scratch_operands = 0 : i64, tpu.core_type = #tpu.core_type<tc>, window_params = [{transform_indices = @transform_0, window_bounds = array<i64: 16, 16>}, {pipeline_mode = #tpu.pipeline_mode<synchronous>, transform_indices = @transform_1, window_bounds = array<i64: 16, 8>}, {transform_indices = @transform_2, window_bounds = array<i64: 1, 1, 8>}, {transform_indices = @transform_3, window_bounds = array<i64: 1, 1, 8>}]} {
    %c0 = arith.constant 0 : index
    %c0_0 = arith.constant 0 : index
    %0 = vector.load %arg1[%c0, %c0_0] : memref<16x16xbf16, #tpu.memory_space<vmem>>, vector<16x16xbf16>
    %c0_1 = arith.constant 0 : index
    %c0_2 = arith.constant 0 : index
    %1 = vector.load %arg2[%c0_1, %c0_2] : memref<16x8xbf16, #tpu.memory_space<vmem>>, vector<16x8xbf16>
    %cst = arith.constant dense<0.000000e+00> : vector<16x8xf32>
    %2 = tpu.matmul %0, %1, %cst {dimension_numbers = #tpu.dot_dimension_numbers<[1], [0], [0], [1], [0, 0, 1, 1], [], []>} : vector<16x16xbf16>, vector<16x8xbf16>, vector<16x8xf32> -> vector<16x8xf32>
    %cst_3 = arith.constant dense<0.000000e+00> : vector<8xf32>
    %3 = vector.multi_reduction <add>, %2, %cst_3 [0] : vector<16x8xf32> to vector<8xf32>
    %4 = vector.shape_cast %3 : vector<8xf32> to vector<1x8xf32>
    %cst_4 = arith.constant 6.250000e-02 : f32
    %5 = vector.broadcast %cst_4 : f32 to vector<1x8xf32>
    %6 = arith.mulf %4, %5 : vector<1x8xf32>
    %7 = vector.broadcast %6 : vector<1x8xf32> to vector<16x8xf32>
    %8 = arith.subf %2, %7 : vector<16x8xf32>
    %9 = arith.mulf %8, %8 : vector<16x8xf32>
    %cst_5 = arith.constant dense<0.000000e+00> : vector<8xf32>
    %10 = vector.multi_reduction <add>, %9, %cst_5 [0] : vector<16x8xf32> to vector<8xf32>
    %11 = vector.shape_cast %10 : vector<8xf32> to vector<1x8xf32>
    %c0_6 = arith.constant 0 : index
    %c0_7 = arith.constant 0 : index
    %c0_8 = arith.constant 0 : index
    %12 = vector.load %arg3[%c0_6, %c0_7, %c0_8] : memref<1x1x8xf32, #tpu.memory_space<vmem>>, vector<1x1x8xf32>
    %13 = vector.shape_cast %12 : vector<1x1x8xf32> to vector<1x8xf32>
    %14 = vector.shape_cast %4 : vector<1x8xf32> to vector<1x1x8xf32>
    tpu.vector_store %arg3[%c0_6, %c0_7, %c0_8], %14 {strides = array<i32>} : memref<1x1x8xf32, #tpu.memory_space<vmem>>, vector<1x1x8xf32>,
    %c0_9 = arith.constant 0 : index
    %c0_10 = arith.constant 0 : index
    %c0_11 = arith.constant 0 : index
    %15 = vector.load %arg4[%c0_9, %c0_10, %c0_11] : memref<1x1x8xf32, #tpu.memory_space<vmem>>, vector<1x1x8xf32>
    %16 = vector.shape_cast %15 : vector<1x1x8xf32> to vector<1x8xf32>
    %17 = vector.shape_cast %11 : vector<1x8xf32> to vector<1x1x8xf32>
    tpu.vector_store %arg4[%c0_9, %c0_10, %c0_11], %17 {strides = array<i32>} : memref<1x1x8xf32, #tpu.memory_space<vmem>>, vector<1x1x8xf32>,
    return
  }
  func.func @transform_0(%arg0: i32) -> (i32, i32) {
    %c0_i32 = arith.constant 0 : i32
    %c0_i32_0 = arith.constant 0 : i32
    return %arg0, %c0_i32 : i32, i32
  }
  func.func @transform_1(%arg0: i32) -> (i32, i32) {
    %c0_i32 = arith.constant 0 : i32
    %c0_i32_0 = arith.constant 0 : i32
    %c0_i32_1 = arith.constant 0 : i32
    return %c0_i32, %c0_i32_0 : i32, i32
  }
  func.func @transform_2(%arg0: i32) -> (i32, i32, i32) {
    %c0_i32 = arith.constant 0 : i32
    %c0_i32_0 = arith.constant 0 : i32
    %c0_i32_1 = arith.constant 0 : i32
    return %arg0, %c0_i32, %c0_i32_0 : i32, i32, i32
  }
  func.func @transform_3(%arg0: i32) -> (i32, i32, i32) {
    %c0_i32 = arith.constant 0 : i32
    %c0_i32_0 = arith.constant 0 : i32
    %c0_i32_1 = arith.constant 0 : i32
    return %arg0, %c0_i32, %c0_i32_0 : i32, i32, i32
  }
}

module attributes {stable_mosaic.version = 11 : i64} {
  func.func @_conv_bn_relu_pool_kernel(%arg0: i32, %arg1: memref<16x16xbf16, #tpu.memory_space<vmem>>, %arg2: memref<16x16xbf16, #tpu.memory_space<vmem>>, %arg3: memref<16x8xbf16, #tpu.memory_space<vmem>>, %arg4: memref<1x8xf32, #tpu.memory_space<vmem>>, %arg5: memref<1x8xf32, #tpu.memory_space<vmem>>, %arg6: memref<16x8xf32, #tpu.memory_space<vmem>>) attributes {dimension_semantics = [#tpu.dimension_semantics<parallel>], iteration_bounds = array<i64: 1>, scalar_prefetch = 0 : i64, scratch_operands = 0 : i64, tpu.core_type = #tpu.core_type<tc>, window_params = [{transform_indices = @transform_0, window_bounds = array<i64: 16, 16>}, {transform_indices = @transform_1, window_bounds = array<i64: 16, 16>}, {pipeline_mode = #tpu.pipeline_mode<synchronous>, transform_indices = @transform_2, window_bounds = array<i64: 16, 8>}, {pipeline_mode = #tpu.pipeline_mode<synchronous>, transform_indices = @transform_3, window_bounds = array<i64: 1, 8>}, {pipeline_mode = #tpu.pipeline_mode<synchronous>, transform_indices = @transform_4, window_bounds = array<i64: 1, 8>}, {transform_indices = @transform_5, window_bounds = array<i64: 16, 8>}]} {
    %c0 = arith.constant 0 : index
    %c0_0 = arith.constant 0 : index
    %0 = vector.load %arg3[%c0, %c0_0] : memref<16x8xbf16, #tpu.memory_space<vmem>>, vector<16x8xbf16>
    %c0_1 = arith.constant 0 : index
    %c0_2 = arith.constant 0 : index
    %1 = vector.load %arg4[%c0_1, %c0_2] : memref<1x8xf32, #tpu.memory_space<vmem>>, vector<1x8xf32>
    %c0_3 = arith.constant 0 : index
    %c0_4 = arith.constant 0 : index
    %2 = vector.load %arg5[%c0_3, %c0_4] : memref<1x8xf32, #tpu.memory_space<vmem>>, vector<1x8xf32>
    %c0_5 = arith.constant 0 : index
    %c0_6 = arith.constant 0 : index
    %3 = vector.load %arg1[%c0_5, %c0_6] : memref<16x16xbf16, #tpu.memory_space<vmem>>, vector<16x16xbf16>
    %cst = arith.constant dense<0.000000e+00> : vector<16x8xf32>
    %4 = tpu.matmul %3, %0, %cst {dimension_numbers = #tpu.dot_dimension_numbers<[1], [0], [0], [1], [0, 0, 1, 1], [], []>} : vector<16x16xbf16>, vector<16x8xbf16>, vector<16x8xf32> -> vector<16x8xf32>
    %c0_7 = arith.constant 0 : index
    %c0_8 = arith.constant 0 : index
    %5 = vector.load %arg2[%c0_7, %c0_8] : memref<16x16xbf16, #tpu.memory_space<vmem>>, vector<16x16xbf16>
    %cst_9 = arith.constant dense<0.000000e+00> : vector<16x8xf32>
    %6 = tpu.matmul %5, %0, %cst_9 {dimension_numbers = #tpu.dot_dimension_numbers<[1], [0], [0], [1], [0, 0, 1, 1], [], []>} : vector<16x16xbf16>, vector<16x8xbf16>, vector<16x8xf32> -> vector<16x8xf32>
    %7 = vector.broadcast %1 : vector<1x8xf32> to vector<16x8xf32>
    %8 = arith.mulf %4, %7 : vector<16x8xf32>
    %9 = vector.broadcast %2 : vector<1x8xf32> to vector<16x8xf32>
    %10 = arith.addf %8, %9 : vector<16x8xf32>
    %cst_10 = arith.constant 0.000000e+00 : f32
    %11 = vector.broadcast %cst_10 : f32 to vector<16x8xf32>
    %12 = arith.maximumf %10, %11 : vector<16x8xf32>
    %13 = vector.broadcast %1 : vector<1x8xf32> to vector<16x8xf32>
    %14 = arith.mulf %6, %13 : vector<16x8xf32>
    %15 = vector.broadcast %2 : vector<1x8xf32> to vector<16x8xf32>
    %16 = arith.addf %14, %15 : vector<16x8xf32>
    %cst_11 = arith.constant 0.000000e+00 : f32
    %17 = vector.broadcast %cst_11 : f32 to vector<16x8xf32>
    %18 = arith.maximumf %16, %17 : vector<16x8xf32>
    %19 = arith.maximumf %12, %18 : vector<16x8xf32>
    %c0_12 = arith.constant 0 : index
    %c0_13 = arith.constant 0 : index
    %20 = vector.load %arg6[%c0_12, %c0_13] : memref<16x8xf32, #tpu.memory_space<vmem>>, vector<16x8xf32>
    tpu.vector_store %arg6[%c0_12, %c0_13], %19 {strides = array<i32>} : memref<16x8xf32, #tpu.memory_space<vmem>>, vector<16x8xf32>,
    return
  }
  func.func @transform_0(%arg0: i32) -> (i32, i32) {
    %c0_i32 = arith.constant 0 : i32
    %c0_i32_0 = arith.constant 0 : i32
    return %arg0, %c0_i32 : i32, i32
  }
  func.func @transform_1(%arg0: i32) -> (i32, i32) {
    %c1_i32 = arith.constant 1 : i32
    %0 = arith.addi %arg0, %c1_i32 : i32
    %c0_i32 = arith.constant 0 : i32
    %c0_i32_0 = arith.constant 0 : i32
    return %0, %c0_i32 : i32, i32
  }
  func.func @transform_2(%arg0: i32) -> (i32, i32) {
    %c0_i32 = arith.constant 0 : i32
    %c0_i32_0 = arith.constant 0 : i32
    %c0_i32_1 = arith.constant 0 : i32
    return %c0_i32, %c0_i32_0 : i32, i32
  }
  func.func @transform_3(%arg0: i32) -> (i32, i32) {
    %c0_i32 = arith.constant 0 : i32
    %c0_i32_0 = arith.constant 0 : i32
    %c0_i32_1 = arith.constant 0 : i32
    return %c0_i32, %c0_i32_0 : i32, i32
  }
  func.func @transform_4(%arg0: i32) -> (i32, i32) {
    %c0_i32 = arith.constant 0 : i32
    %c0_i32_0 = arith.constant 0 : i32
    %c0_i32_1 = arith.constant 0 : i32
    return %c0_i32, %c0_i32_0 : i32, i32
  }
  func.func @transform_5(%arg0: i32) -> (i32, i32) {
    %c0_i32 = arith.constant 0 : i32
    %c0_i32_0 = arith.constant 0 : i32
    return %arg0, %c0_i32 : i32, i32
  }
}

</mosaic_0001>

<llo_original>
// kernel: conv1d_bn_relu_maxpool.3
$region0: #{conv1d_bn_relu_maxpool.3}
  #allocation0 [shape = 'u32[]', space=smem, size = 0x4, offset = 0x4, fixed_abs, tag = 'smem constant byte address 0x4 - core index']
  #allocation1 [shape = 'u32[144,128]{1,0:T(1,128)}', space=vmem, size = 0x12000, scoped, tag = 'internal scratch']
  %s0 = inlined_call_operand.vmem [shape: bf16[32,16], index: 0, kind: input, shape index: {}, may-alias: {0,1}]
  %s1 = inlined_call_operand.vmem [shape: bf16[32,16], index: 1, kind: input, shape index: {}, may-alias: {0,1}]
  %s2 = inlined_call_operand.vmem [shape: bf16[16,8], index: 2, kind: input, shape index: {}]
  %s3 = inlined_call_operand.vmem [shape: f32[1,8], index: 3, kind: input, shape index: {}]
  %s4 = inlined_call_operand.vmem [shape: f32[1,8], index: 4, kind: input, shape index: {}]
  %s5 = inlined_call_operand.vmem [shape: f32[16,8], index: 5, kind: output, shape index: {}]
  %s6 = sld [smem:[#allocation0]]
  $region30: #{conv1d_bn_relu_maxpool.3} parent=0
    _
  %s8 = ssub.s32 1, %s6
  %s9 = scalar_select 0, %s8, %s6
  // Predicated region
  $region2: #{conv1d_bn_relu_maxpool.3} parent=0 // pred_check
    _
  $region3: #{conv1d_bn_relu_maxpool.3} parent=0 // pred_check_branch
    %11 = sbr.rel (0) target = $region5
  $region4: #{conv1d_bn_relu_maxpool.3} parent=0 // pred_region
    _
  $region5: #{conv1d_bn_relu_maxpool.3} parent=0 // pred_fallthru
    _
  // Predicated region
  $region6: #{conv1d_bn_relu_maxpool.3} parent=0 // pred_check
    _
  $region7: #{conv1d_bn_relu_maxpool.3} parent=0 // pred_check_branch
    %13 = sbr.rel (0) target = $region9
  $region8: #{conv1d_bn_relu_maxpool.3} parent=0 // pred_region
    %s14 = sadd.s32 0, 1
    %s15 = smul.u32 2, %s14
    %p16 = scmp.lt.s32.totalorder %s15, 3
    %s17 = scalar_select %p16, %s15, 3
    %s18 = smul.addr %s17, 4
    %s19 = scalar_lea.vmem %s1, %s18
    %s20 = sadd.s32 0, 1
    %s21 = smul.u32 2, %s20
  $region9: #{conv1d_bn_relu_maxpool.3} parent=0 // pred_fallthru
    _
  // Predicated region
  $region10: #{conv1d_bn_relu_maxpool.3} parent=0 // pred_check
    _
  $region11: #{conv1d_bn_relu_maxpool.3} parent=0 // pred_check_branch
    %23 = sbr.rel (0) target = $region13
  $region12: #{conv1d_bn_relu_maxpool.3} parent=0 // pred_region
    _
  $region13: #{conv1d_bn_relu_maxpool.3} parent=0 // pred_fallthru
    _
  // Predicated region
  $region14: #{conv1d_bn_relu_maxpool.3} parent=0 // pred_check
    _
  $region15: #{conv1d_bn_relu_maxpool.3} parent=0 // pred_check_branch
    %25 = sbr.rel (0) target = $region17
  $region16: #{conv1d_bn_relu_maxpool.3} parent=0 // pred_region
    _
  $region17: #{conv1d_bn_relu_maxpool.3} parent=0 // pred_fallthru
    _
  // Predicated region
  $region18: #{conv1d_bn_relu_maxpool.3} parent=0 // pred_check
    _
  $region19: #{conv1d_bn_relu_maxpool.3} parent=0 // pred_check_branch
    %27 = sbr.rel (0) target = $region21
  $region20: #{conv1d_bn_relu_maxpool.3} parent=0 // pred_region
    _
  $region21: #{conv1d_bn_relu_maxpool.3} parent=0 // pred_fallthru
    _
  %s28 = sadd.s32 0, 1
  %s29 = smul.u32 2, %s28
  %p30 = scmp.lt.s32.totalorder %s29, 3
  %s31 = scalar_select %p30, %s29, 3
  %s32 = smul.addr %s31, 4
  %s33 = scalar_lea.vmem %s1, %s32
  %s34 = sadd.s32 0, 1
  %s35 = smul.u32 2, %s34
  %p36 = scmp.lt.s32.totalorder %s35, 3
  %s37 = scalar_select %p36, %s35, 3
  %s38 = smul.addr %s37, 4
  %s39 = scalar_lea.vmem %s1, %s38
  %s40 = sadd.s32 0, 1
  %s41 = smul.u32 2, %s40
  %v43 = vld [vmem:[%s2] sm:$0xf]
  %v44 = vld [vmem:[%s2 + $0x4] sm:$0xf]
  %v45 = vld [vmem:[%s3] sm:$0x1]
  %v46 = vld [vmem:[%s4] sm:$0x1]
  %v47 = vld [vmem:[%s0] sm:$0xf]
  %v48 = vld [vmem:[%s0 + $0x4] sm:$0xf]
  %v51 = vunpack.c.l.b16 %v47
  %v52 = vunpack.c.l.b16 %v48
  %v53 = vpack.c.b16 %v52, %v51
  %v56 = vunpack.c.l.b16 %v43
  %v57 = vunpack.c.l.b16 %v44
  %v58 = vpack.c.b16 %v57, %v56
  %vm60 = vcmask 130048
  %v62 = vsel %vm60, %v53, 0
  %64 = vmatprep.subr.bf16.mxu0 0
  %65 = vmatpush1.bf16.msra.mxu0 0
  %66 = vmatprep.subr.bf16.mxu0 0
  %67 = vmatpush1.bf16.msra.mxu0 0
  %68 = vmatprep.subr.bf16.mxu0 0
  %69 = vmatpush1.bf16.msra.mxu0 0
  %70 = vmatprep.subr.bf16.mxu0 0
  %71 = vmatpush1.bf16.msra.mxu0 0
  %72 = vmatprep.subr.bf16.mxu0 0
  %73 = vmatpush1.bf16.msra.mxu0 0
  %74 = vmatprep.subr.bf16.mxu0 0
  %75 = vmatpush1.bf16.msra.mxu0 0
  %76 = vmatprep.subr.bf16.mxu0 0
  %77 = vmatpush1.bf16.msra.mxu0 0
  %78 = vmatprep.subr.bf16.mxu0 0
  %79 = vmatpush1.bf16.msra.mxu0 %v58
  %80 = vmatprep.subr.bf16.mxu0 0
  %81 = vmatpush2.bf16.msra.mxu0 0
  %82 = vmatprep.subr.bf16.mxu0 0
  %83 = vmatpush2.bf16.msra.mxu0 0
  %84 = vmatprep.subr.bf16.mxu0 0
  %85 = vmatpush2.bf16.msra.mxu0 0
  %86 = vmatprep.subr.bf16.mxu0 0
  %87 = vmatpush2.bf16.msra.mxu0 0
  %88 = vmatprep.subr.bf16.mxu0 0
  %89 = vmatpush2.bf16.msra.mxu0 0
  %90 = vmatprep.subr.bf16.mxu0 0
  %91 = vmatpush2.bf16.msra.mxu0 0
  %92 = vmatprep.subr.bf16.mxu0 0
  %93 = vmatpush2.bf16.msra.mxu0 0
  %94 = vmatprep.subr.bf16.mxu0 0
  %95 = vmatpush2.bf16.msra.mxu0 0
  %96 = vmatprep.mubr.bf16.mxu0 0
  %97 = vmatmul.mubr.bf16.gmra.mxu0 %v62
  %v98 = vpop.f32.mrf.mxu0
  %v99 = vadd.f32 0.0, %v98
  %v100 = vpop.f32.mrf.mxu0
  %v101 = vpop.f32.mrf.mxu0
  %v102 = vadd.f32 0.0, %v101
  %v103 = vpop.f32.mrf.mxu0
  %104 = vdwg.mxu0
  %v105 = vld [vmem:[%s39] sm:$0xf]
  %v106 = vld [vmem:[%s39 + $0x4] sm:$0xf]
  %v109 = vunpack.c.l.b16 %v105
  %v110 = vunpack.c.l.b16 %v106
  %v111 = vpack.c.b16 %v110, %v109
  %v113 = vsel %vm60, %v111, 0
  %115 = vmatprep.subr.bf16.mxu0 0
  %116 = vmatpush1.bf16.msra.mxu0 0
  %117 = vmatprep.subr.bf16.mxu0 0
  %118 = vmatpush1.bf16.msra.mxu0 0
  %119 = vmatprep.subr.bf16.mxu0 0
  %120 = vmatpush1.bf16.msra.mxu0 0
  %121 = vmatprep.subr.bf16.mxu0 0
  %122 = vmatpush1.bf16.msra.mxu0 0
  %123 = vmatprep.subr.bf16.mxu0 0
  %124 = vmatpush1.bf16.msra.mxu0 0
  %125 = vmatprep.subr.bf16.mxu0 0
  %126 = vmatpush1.bf16.msra.mxu0 0
  %127 = vmatprep.subr.bf16.mxu0 0
  %128 = vmatpush1.bf16.msra.mxu0 0
  %129 = vmatprep.subr.bf16.mxu0 0
  %130 = vmatpush1.bf16.msra.mxu0 %v58
  %131 = vmatprep.subr.bf16.mxu0 0
  %132 = vmatpush2.bf16.msra.mxu0 0
  %133 = vmatprep.subr.bf16.mxu0 0
  %134 = vmatpush2.bf16.msra.mxu0 0
  %135 = vmatprep.subr.bf16.mxu0 0
  %136 = vmatpush2.bf16.msra.mxu0 0
  %137 = vmatprep.subr.bf16.mxu0 0
  %138 = vmatpush2.bf16.msra.mxu0 0
  %139 = vmatprep.subr.bf16.mxu0 0
  %140 = vmatpush2.bf16.msra.mxu0 0
  %141 = vmatprep.subr.bf16.mxu0 0
  %142 = vmatpush2.bf16.msra.mxu0 0
  %143 = vmatprep.subr.bf16.mxu0 0
  %144 = vmatpush2.bf16.msra.mxu0 0
  %145 = vmatprep.subr.bf16.mxu0 0
  %146 = vmatpush2.bf16.msra.mxu0 0
  %147 = vmatprep.mubr.bf16.mxu0 0
  %148 = vmatmul.mubr.bf16.gmra.mxu0 %v113
  %v149 = vpop.f32.mrf.mxu0
  %v150 = vadd.f32 0.0, %v149
  %v151 = vpop.f32.mrf.mxu0
  %v152 = vpop.f32.mrf.mxu0
  %v153 = vadd.f32 0.0, %v152
  %v154 = vpop.f32.mrf.mxu0
  %155 = vdwg.mxu0
  %v157 = vlaneseq
  %v158 = vshrl.u32 %v157, 7
  %v159 = vsub.s32 0, %v158
  %v160 = vrot.slane %v45, %v159
  %v162 = vmul.f32 %v99, %v160
  %v163 = vmul.f32 %v102, %v160
  %v165 = vlaneseq
  %v166 = vshrl.u32 %v165, 7
  %v167 = vsub.s32 0, %v166
  %v168 = vrot.slane %v46, %v167
  %v170 = vadd.f32 %v162, %v168
  %v171 = vadd.f32 %v163, %v168
  %v172 = vmax.f32 %v170, 0.0
  %v173 = vmax.f32 %v171, 0.0
  %v174 = vmul.f32 %v150, %v160
  %v175 = vmul.f32 %v153, %v160
  %v176 = vadd.f32 %v174, %v168
  %v177 = vadd.f32 %v175, %v168
  %v178 = vmax.f32 %v176, 0.0
  %v179 = vmax.f32 %v177, 0.0
  %v180 = vmax.f32 %v172, %v178
  %v181 = vmax.f32 %v173, %v179
  %vm182 = vcmask 64512
  %183 = vst.msk [vmem:[%s5] sm:$0xff] %vm182, %v180
  %184 = vst.msk [vmem:[%s5 + $0x8] sm:$0xff] %vm182, %v181
  // Predicated region
  $region22: #{conv1d_bn_relu_maxpool.3} parent=0 // pred_check
    _
  $region23: #{conv1d_bn_relu_maxpool.3} parent=0 // pred_check_branch
    %186 = sbr.rel (0) target = $region25
  $region24: #{conv1d_bn_relu_maxpool.3} parent=0 // pred_region
    _
  $region25: #{conv1d_bn_relu_maxpool.3} parent=0 // pred_fallthru
    _
  // Predicated region
  $region26: #{conv1d_bn_relu_maxpool.3} parent=0 // pred_check
    _
  $region27: #{conv1d_bn_relu_maxpool.3} parent=0 // pred_check_branch
    %188 = sbr.rel (0) target = $region29
  $region28: #{conv1d_bn_relu_maxpool.3} parent=0 // pred_region
    _
  $region29: #{conv1d_bn_relu_maxpool.3} parent=0 // pred_fallthru
    _

// kernel: conv1d_bn_relu_maxpool.2
$region0: #{conv1d_bn_relu_maxpool.2}
  #allocation0 [shape = 'u32[]', space=smem, size = 0x4, offset = 0x4, fixed_abs, tag = 'smem constant byte address 0x4 - core index']
  #allocation1 [shape = 'u32[144,128]{1,0:T(1,128)}', space=vmem, size = 0x12000, scoped, tag = 'internal scratch']
  %s0 = inlined_call_operand.vmem [shape: bf16[32,16], index: 0, kind: input, shape index: {}]
  %s1 = inlined_call_operand.vmem [shape: bf16[16,8], index: 1, kind: input, shape index: {}]
  %s2 = inlined_call_operand.vmem [shape: f32[2,1,8], index: 2, kind: output, shape index: {0}]
  %s3 = inlined_call_operand.vmem [shape: f32[2,1,8], index: 3, kind: output, shape index: {1}]
  %4 = xla_tuple %s2, %s3
  %s5 = sld [smem:[#allocation0]]
  $region49: #{conv1d_bn_relu_maxpool.2} parent=0
    _
  %s7 = ssub.s32 1, %s5
  %s8 = scalar_select 0, %s7, %s5
  loop: start=0, step=1, limit=4
  $region2: #{conv1d_bn_relu_maxpool.2} parent=0 // loop_pre_header
    _
  $region3: #{conv1d_bn_relu_maxpool.2} parent=0 // loop_header
    %s10 = sphi 0, %s14
    %p11 = scmp.ge.s32.totalorder %s10, 4
    %s20 = sphi 0, %s22
    %s23 = sphi 0, %s20
    %s24 = sphi 0, %s23
    %s40 = sphi 0, %s24
    %s44 = sphi 0, %s44
    %s46 = sphi 0, %s44
    %s47 = sphi 0, %s46
    %s61 = sphi 0, %s47
    %s67 = sphi 0, %s69
    %s70 = sphi 0, %s67
    %s71 = sphi 0, %s70
    %s87 = sphi 0, %s71
    %s93 = sphi 0, %s95
    %s96 = sphi 0, %s93
    %s97 = sphi 0, %s96
    %s113 = sphi 0, %s97
  $region4: #{conv1d_bn_relu_maxpool.2} parent=0 // loop_header_branch
    %13 = sbr.rel (%p11) target = $region8
  $region5: #{conv1d_bn_relu_maxpool.2} parent=0 // loop_body
    %s15 = ssub.s32 %s10, 1
    %s16 = ssub.s32 %s10, 2
    %s17 = sadd.s32 %s10, 1
    %s18 = ssub.s32 %s10, %s17
    %p19 = scmp.eq.s32.totalorder %s18, 0
    %s21 = sadd.s32 %s20, 1
    %s22 = scalar_select %p19, %s20, %s21
    %p25 = pneg %p19
    %p26 = scmp.eq.s32.totalorder %s10, 1
    %p27 = por %p25, %p26
    %p28 = scmp.ne.s32.totalorder %s20, %s23
    %p29 = scmp.eq.s32.totalorder %s10, 0
    %p30 = por %p28, %p29
    %p31 = scmp.ne.s32.totalorder %s20, %s23
    %p32 = scmp.eq.s32.totalorder %s15, 1
    %p33 = por %p31, %p32
    %p34 = scmp.ne.s32.totalorder %s23, %s24
    %p35 = scmp.eq.s32.totalorder %s15, 0
    %p36 = por %p34, %p35
    %p37 = scmp.ne.s32.totalorder %s23, %s24
    %p38 = scmp.eq.s32.totalorder %s16, 1
    %p39 = por %p37, %p38
    %p41 = scmp.ne.s32.totalorder %s24, %s40
    %p42 = scmp.eq.s32.totalorder %s16, 0
    %p43 = por %p41, %p42
    %s45 = sadd.s32 %s44, 1
    %p48 = scmp.eq.s32.totalorder %s10, 1
    %p49 = scmp.ne.s32.totalorder %s44, %s46
    %p50 = scmp.eq.s32.totalorder %s10, 0
    %p51 = por %p49, %p50
    %p52 = scmp.ne.s32.totalorder %s44, %s46
    %p53 = scmp.eq.s32.totalorder %s15, 1
    %p54 = por %p52, %p53
    %p55 = scmp.ne.s32.totalorder %s46, %s47
    %p56 = scmp.eq.s32.totalorder %s15, 0
    %p57 = por %p55, %p56
    %p58 = scmp.ne.s32.totalorder %s46, %s47
    %p59 = scmp.eq.s32.totalorder %s16, 1
    %p60 = por %p58, %p59
    %p62 = scmp.ne.s32.totalorder %s47, %s61
    %p63 = scmp.eq.s32.totalorder %s16, 0
    %p64 = por %p62, %p63
    %s65 = ssub.s32 %s10, %s17
    %p66 = scmp.eq.s32.totalorder %s65, 0
    %s68 = sadd.s32 %s67, 1
    %s69 = scalar_select %p66, %s67, %s68
    %p72 = pneg %p66
    %p73 = scmp.eq.s32.totalorder %s10, 1
    %p74 = por %p72, %p73
    %p75 = scmp.ne.s32.totalorder %s67, %s70
    %p76 = scmp.eq.s32.totalorder %s10, 0
    %p77 = por %p75, %p76
    %p78 = scmp.ne.s32.totalorder %s67, %s70
    %p79 = scmp.eq.s32.totalorder %s15, 1
    %p80 = por %p78, %p79
    %p81 = scmp.ne.s32.totalorder %s70, %s71
    %p82 = scmp.eq.s32.totalorder %s15, 0
    %p83 = por %p81, %p82
    %p84 = scmp.ne.s32.totalorder %s70, %s71
    %p85 = scmp.eq.s32.totalorder %s16, 1
    %p86 = por %p84, %p85
    %p88 = scmp.ne.s32.totalorder %s71, %s87
    %p89 = scmp.eq.s32.totalorder %s16, 0
    %p90 = por %p88, %p89
    %s91 = ssub.s32 %s10, %s17
    %p92 = scmp.eq.s32.totalorder %s91, 0
    %s94 = sadd.s32 %s93, 1
    %s95 = scalar_select %p92, %s93, %s94
    %p98 = pneg %p92
    %p99 = scmp.eq.s32.totalorder %s10, 1
    %p100 = por %p98, %p99
    %p101 = scmp.ne.s32.totalorder %s93, %s96
    %p102 = scmp.eq.s32.totalorder %s10, 0
    %p103 = por %p101, %p102
    %p104 = scmp.ne.s32.totalorder %s93, %s96
    %p105 = scmp.eq.s32.totalorder %s15, 1
    %p106 = por %p104, %p105
    %p107 = scmp.ne.s32.totalorder %s96, %s97
    %p108 = scmp.eq.s32.totalorder %s15, 0
    %p109 = por %p107, %p108
    %p110 = scmp.ne.s32.totalorder %s96, %s97
    %p111 = scmp.eq.s32.totalorder %s16, 1
    %p112 = por %p110, %p111
    %p114 = scmp.ne.s32.totalorder %s97, %s113
    %p115 = scmp.eq.s32.totalorder %s16, 0
    %p116 = por %p114, %p115
    %p117 = scmp.le.s32.totalorder 1, %s10
    %p118 = scmp.lt.s32.totalorder %s10, 3
    %p119 = pnand %p117, %p118
    %p120 = pneg %p119
    // Predicated region
    $region9: #{conv1d_bn_relu_maxpool.2} parent=5 // pred_check
      _
    $region10: #{conv1d_bn_relu_maxpool.2} parent=5 // pred_check_branch
      %122 = sbr.rel (%p119) target = $region12
    $region11: #{conv1d_bn_relu_maxpool.2} parent=5 // pred_region
      %s123 = ssub.s32 %s10, 1
      // Predicated region
      $region13: #{conv1d_bn_relu_maxpool.2} parent=11 // pred_check
        %p124 = pneg %p57
      $region14: #{conv1d_bn_relu_maxpool.2} parent=11 // pred_check_branch
        %126 = sbr.rel (%p124) target = $region16
      $region15: #{conv1d_bn_relu_maxpool.2} parent=11 // pred_region
        _
      $region16: #{conv1d_bn_relu_maxpool.2} parent=11 // pred_fallthru
        _
    $region12: #{conv1d_bn_relu_maxpool.2} parent=5 // pred_fallthru
      _
    %p127 = scmp.lt.s32.totalorder %s10, 2
    // Predicated region
    $region17: #{conv1d_bn_relu_maxpool.2} parent=5 // pred_check
      %p128 = pneg %p127
    $region18: #{conv1d_bn_relu_maxpool.2} parent=5 // pred_check_branch
      %130 = sbr.rel (%p128) target = $region20
    $region19: #{conv1d_bn_relu_maxpool.2} parent=5 // pred_region
      // Predicated region
      $region21: #{conv1d_bn_relu_maxpool.2} parent=19 // pred_check
        %p131 = pneg %p30
      $region22: #{conv1d_bn_relu_maxpool.2} parent=19 // pred_check_branch
        %133 = sbr.rel (%p131) target = $region24
      $region23: #{conv1d_bn_relu_maxpool.2} parent=19 // pred_region
        %s134 = smul.u32 2, %s10
        %p135 = scmp.lt.s32.totalorder %s134, 3
        %s136 = scalar_select %p135, %s134, 3
        %s137 = smul.addr %s136, 4
        %s138 = scalar_lea.vmem %s0, %s137
        %s139 = smul.u32 2, %s10
      $region24: #{conv1d_bn_relu_maxpool.2} parent=19 // pred_fallthru
        _
    $region20: #{conv1d_bn_relu_maxpool.2} parent=5 // pred_fallthru
      _
    %p140 = scmp.le.s32.totalorder 1, %s10
    %p141 = scmp.lt.s32.totalorder %s10, 3
    %p142 = pnand %p140, %p141
    %p143 = pneg %p142
    // Predicated region
    $region25: #{conv1d_bn_relu_maxpool.2} parent=5 // pred_check
      _
    $region26: #{conv1d_bn_relu_maxpool.2} parent=5 // pred_check_branch
      %145 = sbr.rel (%p142) target = $region28
    $region27: #{conv1d_bn_relu_maxpool.2} parent=5 // pred_region
      %s146 = ssub.s32 %s10, 1
      %s147 = smul.u32 2, %s15
      %p148 = scmp.lt.s32.totalorder %s147, 3
      %s149 = scalar_select %p148, %s147, 3
      %s150 = smul.addr %s149, 4
      %s151 = scalar_lea.vmem %s0, %s150
      %p152 = pneg %p36
      %p153 = pneg %p33
      %p154 = pneg %p57
      %p155 = pneg %p54
      %p156 = pneg %p83
      %p157 = pneg %p80
      %p158 = scmp.lt.s32.totalorder %s15, 1
      %s159 = scalar_select %p158, %s15, 1
      %s160 = scalar_lea.vmem %s2, %s159
      %p161 = pneg %p109
      %p162 = pneg %p106
      %p163 = scmp.lt.s32.totalorder %s15, 1
      %s164 = scalar_select %p163, %s15, 1
      %s165 = scalar_lea.vmem %s3, %s164
      %s166 = smul.u32 2, %s15
      %p167 = scmp.lt.s32.totalorder %s166, 3
      %s168 = scalar_select %p167, %s166, 3
      %s169 = smul.addr %s168, 4
      %s170 = scalar_lea.vmem %s0, %s169
      %s171 = smul.u32 2, %s15
      %p172 = scmp.lt.s32.totalorder %s15, 1
      %s173 = scalar_select %p172, %s15, 1
      %s174 = scalar_lea.vmem %s2, %s173
      %p175 = scmp.lt.s32.totalorder %s15, 1
      %s176 = scalar_select %p175, %s15, 1
      %s177 = scalar_lea.vmem %s3, %s176
      %v179 = vld [vmem:[%s170] sm:$0xf]
      %v180 = vld [vmem:[%s170 + $0x4] sm:$0xf]
      %v181 = vld [vmem:[%s1] sm:$0xf]
      %v182 = vld [vmem:[%s1 + $0x4] sm:$0xf]
      %v185 = vunpack.c.l.b16 %v179
      %v186 = vunpack.c.l.b16 %v180
      %v187 = vpack.c.b16 %v186, %v185
      %v190 = vunpack.c.l.b16 %v181
      %v191 = vunpack.c.l.b16 %v182
      %v192 = vpack.c.b16 %v191, %v190
      %vm194 = vcmask 130048
      %v196 = vsel %vm194, %v187, 0
      %198 = vmatprep.subr.bf16.mxu0 0
      %199 = vmatpush1.bf16.msra.mxu0 0
      %200 = vmatprep.subr.bf16.mxu0 0
      %201 = vmatpush1.bf16.msra.mxu0 0
      %202 = vmatprep.subr.bf16.mxu0 0
      %203 = vmatpush1.bf16.msra.mxu0 0
      %204 = vmatprep.subr.bf16.mxu0 0
      %205 = vmatpush1.bf16.msra.mxu0 0
      %206 = vmatprep.subr.bf16.mxu0 0
      %207 = vmatpush1.bf16.msra.mxu0 0
      %208 = vmatprep.subr.bf16.mxu0 0
      %209 = vmatpush1.bf16.msra.mxu0 0
      %210 = vmatprep.subr.bf16.mxu0 0
      %211 = vmatpush1.bf16.msra.mxu0 0
      %212 = vmatprep.subr.bf16.mxu0 0
      %213 = vmatpush1.bf16.msra.mxu0 %v192
      %214 = vmatprep.subr.bf16.mxu0 0
      %215 = vmatpush2.bf16.msra.mxu0 0
      %216 = vmatprep.subr.bf16.mxu0 0
      %217 = vmatpush2.bf16.msra.mxu0 0
      %218 = vmatprep.subr.bf16.mxu0 0
      %219 = vmatpush2.bf16.msra.mxu0 0
      %220 = vmatprep.subr.bf16.mxu0 0
      %221 = vmatpush2.bf16.msra.mxu0 0
      %222 = vmatprep.subr.bf16.mxu0 0
      %223 = vmatpush2.bf16.msra.mxu0 0
      %224 = vmatprep.subr.bf16.mxu0 0
      %225 = vmatpush2.bf16.msra.mxu0 0
      %226 = vmatprep.subr.bf16.mxu0 0
      %227 = vmatpush2.bf16.msra.mxu0 0
      %228 = vmatprep.subr.bf16.mxu0 0
      %229 = vmatpush2.bf16.msra.mxu0 0
      %230 = vmatprep.mubr.bf16.mxu0 0
      %231 = vmatmul.mubr.bf16.gmra.mxu0 %v196
      %v232 = vpop.f32.mrf.mxu0
      %v233 = vadd.f32 0.0, %v232
      %v234 = vpop.f32.mrf.mxu0
      %v235 = vpop.f32.mrf.mxu0
      %v236 = vadd.f32 0.0, %v235
      %v237 = vpop.f32.mrf.mxu0
      %238 = vdwg.mxu0
      %vm239 = vcmask 64512
      %v240 = vsel %vm239, %v233, 0.0
      %v241 = vsel %vm239, %v236, 0.0
      %v242 = vadd.f32 %v240, %v241
      %v243 = vrot.slane %v242, 4
      %v244 = vadd.f32 %v242, %v243
      %v245 = vrot.slane %v244, 2
      %v246 = vadd.f32 %v244, %v245
      %v247 = vrot.slane %v246, 1
      %v248 = vadd.f32 %v246, %v247
      %v249 = vmul.f32 %v248, 0.0625
      %v250 = vsub.f32 %v233, %v249
      %v251 = vsub.f32 %v236, %v249
      %v252 = vmul.f32 %v250, %v250
      %v253 = vmul.f32 %v251, %v251
      %v254 = vsel %vm239, %v252, 0.0
      %v255 = vsel %vm239, %v253, 0.0
      %v256 = vadd.f32 %v254, %v255
      %v257 = vrot.slane %v256, 4
      %v258 = vadd.f32 %v256, %v257
      %v259 = vrot.slane %v258, 2
      %v260 = vadd.f32 %v258, %v259
      %v261 = vrot.slane %v260, 1
      %v262 = vadd.f32 %v260, %v261
      %vm263 = vcmask 57344
      %264 = vst.msk [vmem:[%s174] sm:$0x1] %vm263, %v248
      %265 = vst.msk [vmem:[%s177] sm:$0x1] %vm263, %v262
      %p266 = scmp.lt.s32.totalorder %s15, 1
      %s267 = scalar_select %p266, %s15, 1
      %s268 = scalar_lea.vmem %s2, %s267
      %p269 = scmp.lt.s32.totalorder %s15, 1
      %s270 = scalar_select %p269, %s15, 1
      %s271 = scalar_lea.vmem %s3, %s270
      // Predicated region
      $region29: #{conv1d_bn_relu_maxpool.2} parent=27 // pred_check
        %p272 = pneg %p80
      $region30: #{conv1d_bn_relu_maxpool.2} parent=27 // pred_check_branch
        %274 = sbr.rel (%p272) target = $region32
      $region31: #{conv1d_bn_relu_maxpool.2} parent=27 // pred_region
        _
      $region32: #{conv1d_bn_relu_maxpool.2} parent=27 // pred_fallthru
        _
      // Predicated region
      $region33: #{conv1d_bn_relu_maxpool.2} parent=27 // pred_check
        %p275 = pneg %p106
      $region34: #{conv1d_bn_relu_maxpool.2} parent=27 // pred_check_branch
        %277 = sbr.rel (%p275) target = $region36
      $region35: #{conv1d_bn_relu_maxpool.2} parent=27 // pred_region
        _
      $region36: #{conv1d_bn_relu_maxpool.2} parent=27 // pred_fallthru
        _
    $region28: #{conv1d_bn_relu_maxpool.2} parent=5 // pred_fallthru
      _
    %p278 = scmp.le.s32.totalorder 2, %s10
    // Predicated region
    $region37: #{conv1d_bn_relu_maxpool.2} parent=5 // pred_check
      %p279 = pneg %p278
    $region38: #{conv1d_bn_relu_maxpool.2} parent=5 // pred_check_branch
      %281 = sbr.rel (%p279) target = $region40
    $region39: #{conv1d_bn_relu_maxpool.2} parent=5 // pred_region
      %s282 = ssub.s32 %s10, 2
      // Predicated region
      $region41: #{conv1d_bn_relu_maxpool.2} parent=39 // pred_check
        %p283 = pneg %p86
      $region42: #{conv1d_bn_relu_maxpool.2} parent=39 // pred_check_branch
        %285 = sbr.rel (%p283) target = $region44
      $region43: #{conv1d_bn_relu_maxpool.2} parent=39 // pred_region
        %p286 = scmp.lt.s32.totalorder %s16, 1
        %s287 = scalar_select %p286, %s16, 1
        %s288 = scalar_lea.vmem %s2, %s287
      $region44: #{conv1d_bn_relu_maxpool.2} parent=39 // pred_fallthru
        _
      // Predicated region
      $region45: #{conv1d_bn_relu_maxpool.2} parent=39 // pred_check
        %p289 = pneg %p112
      $region46: #{conv1d_bn_relu_maxpool.2} parent=39 // pred_check_branch
        %291 = sbr.rel (%p289) target = $region48
      $region47: #{conv1d_bn_relu_maxpool.2} parent=39 // pred_region
        %p292 = scmp.lt.s32.totalorder %s16, 1
        %s293 = scalar_select %p292, %s16, 1
        %s294 = scalar_lea.vmem %s3, %s293
      $region48: #{conv1d_bn_relu_maxpool.2} parent=39 // pred_fallthru
        _
    $region40: #{conv1d_bn_relu_maxpool.2} parent=5 // pred_fallthru
      _
  $region6: #{conv1d_bn_relu_maxpool.2} parent=0 // loop_footer
    %s14 = sadd.s32 1, %s10
  $region7: #{conv1d_bn_relu_maxpool.2} parent=0 // loop_footer_branch
    %9 = sbr.rel target = $region3
  $region8: #{conv1d_bn_relu_maxpool.2} parent=0 // loop_exit
    _

</llo_original>
